<compile_context>
chip_gen: v6e
topology: v6e:2x2x1
jax: 0.10.0
libtpu: 0.0.40
codegen_flags: <defaults>
</compile_context>

<pallas_src>
import functools

import jax
import jax.numpy as jnp
from jax.experimental import pallas as pl
from jax.experimental.pallas import tpu as pltpu

IN_FEATURES = 1000
HIDDEN = 200
OUT_FEATURES = 1
TILE_B_DEFAULT = 512  # sized for v7x's smaller VMEM; fine on v5e/v6e too


def _mlp_kernel(x_ref, w1_ref, b1_ref, w2_ref, b2_ref, o_ref):
    # x_ref : (TILE_B, 1000) bf16   (pipelined per grid step)
    # w1_ref: (1000, 200)   bf16   (resident across the grid)
    # b1_ref: (1, 200)      f32    (resident)
    # w2_ref: (1, 200)      f32    (resident; second Linear's weight as a row)
    # b2_ref: (1, 1)        f32    (SMEM scalar)
    # o_ref : (TILE_B, 1)   f32
    h = jnp.dot(x_ref[...], w1_ref[...],
                preferred_element_type=jnp.float32)        # MXU bf16, f32 acc
    h = jnp.maximum(h + b1_ref[...], 0.0)                  # VPU bias + ReLU
    # 200 -> 1 projection as VPU multiply + lane reduction (keeps MXU free).
    y = jnp.sum(h * w2_ref[...], axis=-1, keepdims=True) + b2_ref[0, 0]
    o_ref[...] = y.astype(o_ref.dtype)


def _round_up(n, m):
    return ((n + m - 1) // m) * m


@functools.partial(jax.jit, static_argnames=("tile_b",))
def mynet2_head(x, w1, b1, w2, b2, *, tile_b=TILE_B_DEFAULT):
    """gene1 head of MyNet2: Linear(1000,200) -> ReLU -> Linear(200,1).

    x:  (B, 1000) f32
    w1: (1000, 200) f32, b1: (1, 200) f32
    w2: (200, 1)  f32,  b2: (1, 1)   f32   (weights stored as (in, out))
    returns (B, 1) f32
    """
    B = x.shape[0]
    # Shrink the tile for small B; keep the sublane (8) multiple requirement.
    tile_b = max(8, min(_round_up(B, 8), tile_b))
    grid = (pl.cdiv(B, tile_b),)

    # One-time dtype / layout prep in the wrapper (not per grid step).
    x_bf16 = x.astype(jnp.bfloat16)
    w1_bf16 = w1.astype(jnp.bfloat16)
    w2_row = w2.reshape(1, HIDDEN).astype(jnp.float32)
    b2_s = b2.reshape(1, 1).astype(jnp.float32)

    cost = pl.CostEstimate(
        flops=2 * B * IN_FEATURES * HIDDEN + 3 * B * HIDDEN,
        transcendentals=0,
        bytes_accessed=(x_bf16.size * 2 + w1_bf16.size * 2 + b1.size * 4
                        + w2_row.size * 4 + 4 + B * OUT_FEATURES * 4),
    )

    return pl.pallas_call(
        _mlp_kernel,
        out_shape=jax.ShapeDtypeStruct((B, OUT_FEATURES), jnp.float32),
        grid=grid,
        in_specs=[
            pl.BlockSpec((tile_b, IN_FEATURES), lambda i: (i, 0)),   # x tile
            pl.BlockSpec((IN_FEATURES, HIDDEN), lambda i: (0, 0)),   # W1 resident
            pl.BlockSpec((1, HIDDEN), lambda i: (0, 0)),             # b1 resident
            pl.BlockSpec((1, HIDDEN), lambda i: (0, 0)),             # w2 row resident
            pl.BlockSpec(memory_space=pltpu.MemorySpace.SMEM),       # b2 scalar
        ],
        out_specs=pl.BlockSpec((tile_b, OUT_FEATURES), lambda i: (i, 0)),
        compiler_params=pltpu.CompilerParams(
            dimension_semantics=("parallel",),
            vmem_limit_bytes=32 * 1024 * 1024,
        ),
        cost_estimate=cost,
    )(x_bf16, w1_bf16, b1, w2_row, b2_s)


def init_params(key):
    """Deterministic parameter init (shapes from MyNet2.__init__)."""
    k1, k2, k3, k4 = jax.random.split(key, 4)
    # Match nn.Linear's default uniform(-1/sqrt(fan_in), 1/sqrt(fan_in)) scale.
    s1 = 1.0 / jnp.sqrt(IN_FEATURES)
    s2 = 1.0 / jnp.sqrt(HIDDEN)
    w1 = jax.random.uniform(k1, (IN_FEATURES, HIDDEN), jnp.float32, -s1, s1)
    b1 = jax.random.uniform(k2, (1, HIDDEN), jnp.float32, -s1, s1)
    w2 = jax.random.uniform(k3, (HIDDEN, OUT_FEATURES), jnp.float32, -s2, s2)
    b2 = jax.random.uniform(k4, (1, OUT_FEATURES), jnp.float32, -s2, s2)
    return w1, b1, w2, b2


if __name__ == "__main__":
    key = jax.random.PRNGKey(0)
    k_x, k_p = jax.random.split(key)

    B = 16
    # x plays the role of pretrained(x): (B, 1000) feature matrix.
    x = jax.random.normal(k_x, (B, IN_FEATURES), jnp.float32)
    w1, b1, w2, b2 = init_params(k_p)

    out = mynet2_head(x, w1, b1, w2, b2)
    out = jax.block_until_ready(out)
    assert out.shape == (B, OUT_FEATURES)

    # Reference 1: same bf16-input / f32-accumulate math as the kernel.
    h_ref = jnp.dot(x.astype(jnp.bfloat16), w1.astype(jnp.bfloat16),
                    preferred_element_type=jnp.float32) + b1
    h_ref = jnp.maximum(h_ref, 0.0)
    ref_bf16 = jnp.sum(h_ref * w2.reshape(1, -1), axis=-1, keepdims=True) + b2.reshape(1, 1)
    assert jnp.allclose(out, ref_bf16, atol=1e-2, rtol=1e-2)

    # Reference 2: full f32 PyTorch-equivalent math (loose tolerance for bf16 GEMM).
    ref_f32 = jnp.maximum(x @ w1 + b1, 0.0) @ w2 + b2
    assert jnp.allclose(out, ref_f32, atol=5e-2, rtol=5e-2)

    print("KERNEL_OK")
</pallas_src>

<mosaic_0001>
module attributes {stable_mosaic.version = 11 : i64} {
  func.func @_mlp_kernel(%arg0: i32, %arg1: memref<16x1000xbf16, #tpu.memory_space<vmem>>, %arg2: memref<1000x200xbf16, #tpu.memory_space<vmem>>, %arg3: memref<1x200xf32, #tpu.memory_space<vmem>>, %arg4: memref<1x200xf32, #tpu.memory_space<vmem>>, %arg5: memref<1x1xf32, #tpu.memory_space<smem>>, %arg6: memref<16x1xf32, #tpu.memory_space<vmem>>) attributes {dimension_semantics = [#tpu.dimension_semantics<parallel>], iteration_bounds = array<i64: 1>, scalar_prefetch = 0 : i64, scratch_operands = 0 : i64, tpu.core_type = #tpu.core_type<tc>, window_params = [{transform_indices = @transform_0, window_bounds = array<i64: 16, 1000>}, {pipeline_mode = #tpu.pipeline_mode<synchronous>, transform_indices = @transform_1, window_bounds = array<i64: 1000, 200>}, {pipeline_mode = #tpu.pipeline_mode<synchronous>, transform_indices = @transform_2, window_bounds = array<i64: 1, 200>}, {pipeline_mode = #tpu.pipeline_mode<synchronous>, transform_indices = @transform_3, window_bounds = array<i64: 1, 200>}, {transform_indices = @transform_4, window_bounds = array<i64: 1, 1>}, {transform_indices = @transform_5, window_bounds = array<i64: 16, 1>}]} {
    %c0 = arith.constant 0 : index
    %c0_0 = arith.constant 0 : index
    %0 = vector.load %arg1[%c0, %c0_0] : memref<16x1000xbf16, #tpu.memory_space<vmem>>, vector<16x1000xbf16>
    %c0_1 = arith.constant 0 : index
    %c0_2 = arith.constant 0 : index
    %1 = vector.load %arg2[%c0_1, %c0_2] : memref<1000x200xbf16, #tpu.memory_space<vmem>>, vector<1000x200xbf16>
    %cst = arith.constant dense<0.000000e+00> : vector<16x200xf32>
    %2 = tpu.matmul %0, %1, %cst {dimension_numbers = #tpu.dot_dimension_numbers<[1], [0], [0], [1], [0, 0, 1, 1], [], []>} : vector<16x1000xbf16>, vector<1000x200xbf16>, vector<16x200xf32> -> vector<16x200xf32>
    %c0_3 = arith.constant 0 : index
    %c0_4 = arith.constant 0 : index
    %3 = vector.load %arg3[%c0_3, %c0_4] : memref<1x200xf32, #tpu.memory_space<vmem>>, vector<1x200xf32>
    %4 = vector.broadcast %3 : vector<1x200xf32> to vector<16x200xf32>
    %5 = arith.addf %2, %4 : vector<16x200xf32>
    %cst_5 = arith.constant 0.000000e+00 : f32
    %6 = vector.broadcast %cst_5 : f32 to vector<16x200xf32>
    %7 = arith.maximumf %5, %6 : vector<16x200xf32>
    %c0_6 = arith.constant 0 : index
    %c0_7 = arith.constant 0 : index
    %8 = vector.load %arg4[%c0_6, %c0_7] : memref<1x200xf32, #tpu.memory_space<vmem>>, vector<1x200xf32>
    %9 = vector.broadcast %8 : vector<1x200xf32> to vector<16x200xf32>
    %10 = arith.mulf %7, %9 : vector<16x200xf32>
    %cst_8 = arith.constant dense<0.000000e+00> : vector<16xf32>
    %11 = vector.multi_reduction <add>, %10, %cst_8 [1] : vector<16x200xf32> to vector<16xf32>
    %12 = vector.shape_cast %11 : vector<16xf32> to vector<16x1xf32>
    %c0_9 = arith.constant 0 : index
    %c0_10 = arith.constant 0 : index
    %13 = memref.load %arg5[%c0_9, %c0_10] : memref<1x1xf32, #tpu.memory_space<smem>>
    %14 = vector.broadcast %13 : f32 to vector<16x1xf32>
    %15 = arith.addf %12, %14 : vector<16x1xf32>
    %c0_11 = arith.constant 0 : index
    %c0_12 = arith.constant 0 : index
    %16 = vector.load %arg6[%c0_11, %c0_12] : memref<16x1xf32, #tpu.memory_space<vmem>>, vector<16x1xf32>
    tpu.vector_store %arg6[%c0_11, %c0_12], %15 {strides = array<i32>} : memref<16x1xf32, #tpu.memory_space<vmem>>, vector<16x1xf32>,
    return
  }
  func.func @transform_0(%arg0: i32) -> (i32, i32) {
    %c0_i32 = arith.constant 0 : i32
    %c0_i32_0 = arith.constant 0 : i32
    return %arg0, %c0_i32 : i32, i32
  }
  func.func @transform_1(%arg0: i32) -> (i32, i32) {
    %c0_i32 = arith.constant 0 : i32
    %c0_i32_0 = arith.constant 0 : i32
    %c0_i32_1 = arith.constant 0 : i32
    return %c0_i32, %c0_i32_0 : i32, i32
  }
  func.func @transform_2(%arg0: i32) -> (i32, i32) {
    %c0_i32 = arith.constant 0 : i32
    %c0_i32_0 = arith.constant 0 : i32
    %c0_i32_1 = arith.constant 0 : i32
    return %c0_i32, %c0_i32_0 : i32, i32
  }
  func.func @transform_3(%arg0: i32) -> (i32, i32) {
    %c0_i32 = arith.constant 0 : i32
    %c0_i32_0 = arith.constant 0 : i32
    %c0_i32_1 = arith.constant 0 : i32
    return %c0_i32, %c0_i32_0 : i32, i32
  }
  func.func @transform_4(%arg0: i32) -> (i32, i32) {
    %c0_i32 = arith.constant 0 : i32
    %c0_i32_0 = arith.constant 0 : i32
    %c0_i32_1 = arith.constant 0 : i32
    return %c0_i32, %c0_i32_0 : i32, i32
  }
  func.func @transform_5(%arg0: i32) -> (i32, i32) {
    %c0_i32 = arith.constant 0 : i32
    %c0_i32_0 = arith.constant 0 : i32
    return %arg0, %c0_i32 : i32, i32
  }
}

</mosaic_0001>

<llo_original>
// kernel: mynet2_head.1
$region0: #{mynet2_head.1}
  #allocation0 [shape = 'u32[]', space=smem, size = 0x4, offset = 0x4, fixed_abs, tag = 'smem constant byte address 0x4 - core index']
  #allocation1 [shape = 'u32[144,128]{1,0:T(1,128)}', space=vmem, size = 0x12000, scoped, tag = 'internal scratch']
  #allocation2 [shape = 'f32[1,1]{1,0:T(1,128)S(6)}', space=smem, size = 0x200, scoped, tag = 'scoped memory for mynet2_head.1']
  %s0 = inlined_call_operand.vmem [shape: bf16[16,1000], index: 0, kind: input, shape index: {}]
  %s1 = inlined_call_operand.vmem [shape: bf16[1000,200], index: 1, kind: input, shape index: {}]
  %s2 = inlined_call_operand.vmem [shape: f32[1,200], index: 2, kind: input, shape index: {}]
  %s3 = inlined_call_operand.vmem [shape: f32[1,200], index: 3, kind: input, shape index: {}]
  %s4 = inlined_call_operand.<no memory space> [shape: f32[1,1], index: 4, kind: input, shape index: {}]
  %s5 = inlined_call_operand.vmem [shape: f32[16,1], index: 5, kind: output, shape index: {}]
  %s6 = sld [smem:[#allocation0]]
  $region30: #{mynet2_head.1} parent=0
    _
  %s8 = ssub.s32 1, %s6
  %s9 = scalar_select 0, %s8, %s6
  %10 = sst [smem:[#allocation2]] %s4
  // Predicated region
  $region2: #{mynet2_head.1} parent=0 // pred_check
    _
  $region3: #{mynet2_head.1} parent=0 // pred_check_branch
    %12 = sbr.rel (0) target = $region5
  $region4: #{mynet2_head.1} parent=0 // pred_region
    _
  $region5: #{mynet2_head.1} parent=0 // pred_fallthru
    _
  // Predicated region
  $region6: #{mynet2_head.1} parent=0 // pred_check
    _
  $region7: #{mynet2_head.1} parent=0 // pred_check_branch
    %14 = sbr.rel (0) target = $region9
  $region8: #{mynet2_head.1} parent=0 // pred_region
    _
  $region9: #{mynet2_head.1} parent=0 // pred_fallthru
    _
  // Predicated region
  $region10: #{mynet2_head.1} parent=0 // pred_check
    _
  $region11: #{mynet2_head.1} parent=0 // pred_check_branch
    %16 = sbr.rel (0) target = $region13
  $region12: #{mynet2_head.1} parent=0 // pred_region
    _
  $region13: #{mynet2_head.1} parent=0 // pred_fallthru
    _
  // Predicated region
  $region14: #{mynet2_head.1} parent=0 // pred_check
    _
  $region15: #{mynet2_head.1} parent=0 // pred_check_branch
    %18 = sbr.rel (0) target = $region17
  $region16: #{mynet2_head.1} parent=0 // pred_region
    _
  $region17: #{mynet2_head.1} parent=0 // pred_fallthru
    _
  // Predicated region
  $region18: #{mynet2_head.1} parent=0 // pred_check
    _
  $region19: #{mynet2_head.1} parent=0 // pred_check_branch
    %20 = sbr.rel (0) target = $region21
  $region20: #{mynet2_head.1} parent=0 // pred_region
    _
  $region21: #{mynet2_head.1} parent=0 // pred_fallthru
    _
  %v22 = vld [vmem:[%s0] sm:$0xff]
  %v23 = vld [vmem:[%s0 + $0x8] sm:$0xff]
  %v24 = vld [vmem:[%s0 + $0x10] sm:$0xff]
  %v25 = vld [vmem:[%s0 + $0x18] sm:$0xff]
  %v26 = vld [vmem:[%s0 + $0x20] sm:$0xff]
  %v27 = vld [vmem:[%s0 + $0x28] sm:$0xff]
  %v28 = vld [vmem:[%s0 + $0x30] sm:$0xff]
  %v29 = vld [vmem:[%s0 + $0x38] sm:$0xff]
  %v30 = vld [vmem:[%s1] sm:$0xff]
  %v31 = vld [vmem:[%s1 + $0x8] sm:$0xff]
  %v32 = vld [vmem:[%s1 + $0x10] sm:$0xff]
  %v33 = vld [vmem:[%s1 + $0x18] sm:$0xff]
  %v34 = vld [vmem:[%s1 + $0x20] sm:$0xff]
  %v35 = vld [vmem:[%s1 + $0x28] sm:$0xff]
  %v36 = vld [vmem:[%s1 + $0x30] sm:$0xff]
  %v37 = vld [vmem:[%s1 + $0x38] sm:$0xff]
  %v38 = vld [vmem:[%s1 + $0x40] sm:$0xff]
  %v39 = vld [vmem:[%s1 + $0x48] sm:$0xff]
  %v40 = vld [vmem:[%s1 + $0x50] sm:$0xff]
  %v41 = vld [vmem:[%s1 + $0x58] sm:$0xff]
  %v42 = vld [vmem:[%s1 + $0x60] sm:$0xff]
  %v43 = vld [vmem:[%s1 + $0x68] sm:$0xff]
  %v44 = vld [vmem:[%s1 + $0x70] sm:$0xff]
  %v45 = vld [vmem:[%s1 + $0x78] sm:$0xff]
  %v46 = vld [vmem:[%s1 + $0x80] sm:$0xff]
  %v47 = vld [vmem:[%s1 + $0x88] sm:$0xff]
  %v48 = vld [vmem:[%s1 + $0x90] sm:$0xff]
  %v49 = vld [vmem:[%s1 + $0x98] sm:$0xff]
  %v50 = vld [vmem:[%s1 + $0xa0] sm:$0xff]
  %v51 = vld [vmem:[%s1 + $0xa8] sm:$0xff]
  %v52 = vld [vmem:[%s1 + $0xb0] sm:$0xff]
  %v53 = vld [vmem:[%s1 + $0xb8] sm:$0xff]
  %v54 = vld [vmem:[%s1 + $0xc0] sm:$0xff]
  %v55 = vld [vmem:[%s1 + $0xc8] sm:$0xff]
  %v56 = vld [vmem:[%s1 + $0xd0] sm:$0xff]
  %v57 = vld [vmem:[%s1 + $0xd8] sm:$0xff]
  %v58 = vld [vmem:[%s1 + $0xe0] sm:$0xff]
  %v59 = vld [vmem:[%s1 + $0xe8] sm:$0xff]
  %v60 = vld [vmem:[%s1 + $0xf0] sm:$0xff]
  %v61 = vld [vmem:[%s1 + $0xf8] sm:$0xff]
  %v62 = vld [vmem:[%s1 + $0x100] sm:$0xff]
  %v63 = vld [vmem:[%s1 + $0x108] sm:$0xff]
  %v64 = vld [vmem:[%s1 + $0x110] sm:$0xff]
  %v65 = vld [vmem:[%s1 + $0x118] sm:$0xff]
  %v66 = vld [vmem:[%s1 + $0x120] sm:$0xff]
  %v67 = vld [vmem:[%s1 + $0x128] sm:$0xff]
  %v68 = vld [vmem:[%s1 + $0x130] sm:$0xff]
  %v69 = vld [vmem:[%s1 + $0x138] sm:$0xff]
  %v70 = vld [vmem:[%s1 + $0x140] sm:$0xff]
  %v71 = vld [vmem:[%s1 + $0x148] sm:$0xff]
  %v72 = vld [vmem:[%s1 + $0x150] sm:$0xff]
  %v73 = vld [vmem:[%s1 + $0x158] sm:$0xff]
  %v74 = vld [vmem:[%s1 + $0x160] sm:$0xff]
  %v75 = vld [vmem:[%s1 + $0x168] sm:$0xff]
  %v76 = vld [vmem:[%s1 + $0x170] sm:$0xff]
  %v77 = vld [vmem:[%s1 + $0x178] sm:$0xff]
  %v78 = vld [vmem:[%s1 + $0x180] sm:$0xff]
  %v79 = vld [vmem:[%s1 + $0x188] sm:$0xff]
  %v80 = vld [vmem:[%s1 + $0x190] sm:$0xff]
  %v81 = vld [vmem:[%s1 + $0x198] sm:$0xff]
  %v82 = vld [vmem:[%s1 + $0x1a0] sm:$0xff]
  %v83 = vld [vmem:[%s1 + $0x1a8] sm:$0xff]
  %v84 = vld [vmem:[%s1 + $0x1b0] sm:$0xff]
  %v85 = vld [vmem:[%s1 + $0x1b8] sm:$0xff]
  %v86 = vld [vmem:[%s1 + $0x1c0] sm:$0xff]
  %v87 = vld [vmem:[%s1 + $0x1c8] sm:$0xff]
  %v88 = vld [vmem:[%s1 + $0x1d0] sm:$0xff]
  %v89 = vld [vmem:[%s1 + $0x1d8] sm:$0xff]
  %v90 = vld [vmem:[%s1 + $0x1e0] sm:$0xff]
  %v91 = vld [vmem:[%s1 + $0x1e8] sm:$0xff]
  %v92 = vld [vmem:[%s1 + $0x1f0] sm:$0xff]
  %v93 = vld [vmem:[%s1 + $0x1f8] sm:$0xff]
  %v94 = vld [vmem:[%s1 + $0x200] sm:$0xff]
  %v95 = vld [vmem:[%s1 + $0x208] sm:$0xff]
  %v96 = vld [vmem:[%s1 + $0x210] sm:$0xff]
  %v97 = vld [vmem:[%s1 + $0x218] sm:$0xff]
  %v98 = vld [vmem:[%s1 + $0x220] sm:$0xff]
  %v99 = vld [vmem:[%s1 + $0x228] sm:$0xff]
  %v100 = vld [vmem:[%s1 + $0x230] sm:$0xff]
  %v101 = vld [vmem:[%s1 + $0x238] sm:$0xff]
  %v102 = vld [vmem:[%s1 + $0x240] sm:$0xff]
  %v103 = vld [vmem:[%s1 + $0x248] sm:$0xff]
  %v104 = vld [vmem:[%s1 + $0x250] sm:$0xff]
  %v105 = vld [vmem:[%s1 + $0x258] sm:$0xff]
  %v106 = vld [vmem:[%s1 + $0x260] sm:$0xff]
  %v107 = vld [vmem:[%s1 + $0x268] sm:$0xff]
  %v108 = vld [vmem:[%s1 + $0x270] sm:$0xff]
  %v109 = vld [vmem:[%s1 + $0x278] sm:$0xff]
  %v110 = vld [vmem:[%s1 + $0x280] sm:$0xff]
  %v111 = vld [vmem:[%s1 + $0x288] sm:$0xff]
  %v112 = vld [vmem:[%s1 + $0x290] sm:$0xff]
  %v113 = vld [vmem:[%s1 + $0x298] sm:$0xff]
  %v114 = vld [vmem:[%s1 + $0x2a0] sm:$0xff]
  %v115 = vld [vmem:[%s1 + $0x2a8] sm:$0xff]
  %v116 = vld [vmem:[%s1 + $0x2b0] sm:$0xff]
  %v117 = vld [vmem:[%s1 + $0x2b8] sm:$0xff]
  %v118 = vld [vmem:[%s1 + $0x2c0] sm:$0xff]
  %v119 = vld [vmem:[%s1 + $0x2c8] sm:$0xff]
  %v120 = vld [vmem:[%s1 + $0x2d0] sm:$0xff]
  %v121 = vld [vmem:[%s1 + $0x2d8] sm:$0xff]
  %v122 = vld [vmem:[%s1 + $0x2e0] sm:$0xff]
  %v123 = vld [vmem:[%s1 + $0x2e8] sm:$0xff]
  %v124 = vld [vmem:[%s1 + $0x2f0] sm:$0xff]
  %v125 = vld [vmem:[%s1 + $0x2f8] sm:$0xff]
  %v126 = vld [vmem:[%s1 + $0x300] sm:$0xff]
  %v127 = vld [vmem:[%s1 + $0x308] sm:$0xff]
  %v128 = vld [vmem:[%s1 + $0x310] sm:$0xff]
  %v129 = vld [vmem:[%s1 + $0x318] sm:$0xff]
  %v130 = vld [vmem:[%s1 + $0x320] sm:$0xff]
  %v131 = vld [vmem:[%s1 + $0x328] sm:$0xff]
  %v132 = vld [vmem:[%s1 + $0x330] sm:$0xff]
  %v133 = vld [vmem:[%s1 + $0x338] sm:$0xff]
  %v134 = vld [vmem:[%s1 + $0x340] sm:$0xff]
  %v135 = vld [vmem:[%s1 + $0x348] sm:$0xff]
  %v136 = vld [vmem:[%s1 + $0x350] sm:$0xff]
  %v137 = vld [vmem:[%s1 + $0x358] sm:$0xff]
  %v138 = vld [vmem:[%s1 + $0x360] sm:$0xff]
  %v139 = vld [vmem:[%s1 + $0x368] sm:$0xff]
  %v140 = vld [vmem:[%s1 + $0x370] sm:$0xff]
  %v141 = vld [vmem:[%s1 + $0x378] sm:$0xff]
  %v142 = vld [vmem:[%s1 + $0x380] sm:$0xff]
  %v143 = vld [vmem:[%s1 + $0x388] sm:$0xff]
  %v144 = vld [vmem:[%s1 + $0x390] sm:$0xff]
  %v145 = vld [vmem:[%s1 + $0x398] sm:$0xff]
  %v146 = vld [vmem:[%s1 + $0x3a0] sm:$0xff]
  %v147 = vld [vmem:[%s1 + $0x3a8] sm:$0xff]
  %v148 = vld [vmem:[%s1 + $0x3b0] sm:$0xff]
  %v149 = vld [vmem:[%s1 + $0x3b8] sm:$0xff]
  %v150 = vld [vmem:[%s1 + $0x3c0] sm:$0xff]
  %v151 = vld [vmem:[%s1 + $0x3c8] sm:$0xff]
  %v152 = vld [vmem:[%s1 + $0x3d0] sm:$0xff]
  %v153 = vld [vmem:[%s1 + $0x3d8] sm:$0xff]
  %v154 = vld [vmem:[%s1 + $0x3e0] sm:$0xff]
  %v155 = vld [vmem:[%s2] sm:$0x3]
  %v157 = vlaneseq
  %v158 = vshrl.u32 %v157, 7
  %v159 = vsub.s32 0, %v158
  %v160 = vrot.slane %v155, %v159
  %v161 = vlaneseq
  %v162 = vshrl.u32 %v161, 7
  %v163 = vsub.s32 1, %v162
  %v164 = vrot.slane %v155, %v163
  %v175 = vunpack.c.l.b16 %v22
  %v176 = vunpack.c.h.b16 %v22
  %v177 = vunpack.c.l.b16 %v23
  %v178 = vunpack.c.h.b16 %v23
  %v179 = vunpack.c.l.b16 %v24
  %v180 = vunpack.c.h.b16 %v24
  %v181 = vunpack.c.l.b16 %v25
  %v182 = vunpack.c.h.b16 %v25
  %v183 = vunpack.c.l.b16 %v26
  %v184 = vunpack.c.h.b16 %v26
  %v185 = vunpack.c.l.b16 %v27
  %v186 = vunpack.c.h.b16 %v27
  %v187 = vunpack.c.l.b16 %v28
  %v188 = vunpack.c.h.b16 %v28
  %v189 = vunpack.c.l.b16 %v29
  %v190 = vunpack.c.h.b16 %v29
  %v191 = vpack.c.b16 %v183, %v175
  %v192 = vpack.c.b16 %v184, %v176
  %v193 = vpack.c.b16 %v185, %v177
  %v194 = vpack.c.b16 %v186, %v178
  %v195 = vpack.c.b16 %v187, %v179
  %v196 = vpack.c.b16 %v188, %v180
  %v197 = vpack.c.b16 %v189, %v181
  %v198 = vpack.c.b16 %v190, %v182
  %v331 = vunpack.c.l.b16 %v30
  %v332 = vunpack.c.h.b16 %v30
  %v333 = vunpack.c.l.b16 %v31
  %v334 = vunpack.c.h.b16 %v31
  %v335 = vunpack.c.l.b16 %v32
  %v336 = vunpack.c.h.b16 %v32
  %v337 = vunpack.c.l.b16 %v33
  %v338 = vunpack.c.h.b16 %v33
  %v339 = vunpack.c.l.b16 %v34
  %v340 = vunpack.c.h.b16 %v34
  %v341 = vunpack.c.l.b16 %v35
  %v342 = vunpack.c.h.b16 %v35
  %v343 = vunpack.c.l.b16 %v36
  %v344 = vunpack.c.h.b16 %v36
  %v345 = vunpack.c.l.b16 %v37
  %v346 = vunpack.c.h.b16 %v37
  %v347 = vunpack.c.l.b16 %v38
  %v348 = vunpack.c.h.b16 %v38
  %v349 = vunpack.c.l.b16 %v39
  %v350 = vunpack.c.h.b16 %v39
  %v351 = vunpack.c.l.b16 %v40
  %v352 = vunpack.c.h.b16 %v40
  %v353 = vunpack.c.l.b16 %v41
  %v354 = vunpack.c.h.b16 %v41
  %v355 = vunpack.c.l.b16 %v42
  %v356 = vunpack.c.h.b16 %v42
  %v357 = vunpack.c.l.b16 %v43
  %v358 = vunpack.c.h.b16 %v43
  %v359 = vunpack.c.l.b16 %v44
  %v360 = vunpack.c.h.b16 %v44
  %v361 = vunpack.c.l.b16 %v45
  %v362 = vunpack.c.h.b16 %v45
  %v363 = vunpack.c.l.b16 %v46
  %v364 = vunpack.c.h.b16 %v46
  %v365 = vunpack.c.l.b16 %v47
  %v366 = vunpack.c.h.b16 %v47
  %v367 = vunpack.c.l.b16 %v48
  %v368 = vunpack.c.h.b16 %v48
  %v369 = vunpack.c.l.b16 %v49
  %v370 = vunpack.c.h.b16 %v49
  %v371 = vunpack.c.l.b16 %v50
  %v372 = vunpack.c.h.b16 %v50
  %v373 = vunpack.c.l.b16 %v51
  %v374 = vunpack.c.h.b16 %v51
  %v375 = vunpack.c.l.b16 %v52
  %v376 = vunpack.c.h.b16 %v52
  %v377 = vunpack.c.l.b16 %v53
  %v378 = vunpack.c.h.b16 %v53
  %v379 = vunpack.c.l.b16 %v54
  %v380 = vunpack.c.h.b16 %v54
  %v381 = vunpack.c.l.b16 %v55
  %v382 = vunpack.c.h.b16 %v55
  %v383 = vunpack.c.l.b16 %v56
  %v384 = vunpack.c.h.b16 %v56
  %v385 = vunpack.c.l.b16 %v57
  %v386 = vunpack.c.h.b16 %v57
  %v387 = vunpack.c.l.b16 %v58
  %v388 = vunpack.c.h.b16 %v58
  %v389 = vunpack.c.l.b16 %v59
  %v390 = vunpack.c.h.b16 %v59
  %v391 = vunpack.c.l.b16 %v60
  %v392 = vunpack.c.h.b16 %v60
  %v393 = vunpack.c.l.b16 %v61
  %v394 = vunpack.c.h.b16 %v61
  %v395 = vunpack.c.l.b16 %v62
  %v396 = vunpack.c.h.b16 %v62
  %v397 = vunpack.c.l.b16 %v63
  %v398 = vunpack.c.h.b16 %v63
  %v399 = vunpack.c.l.b16 %v64
  %v400 = vunpack.c.h.b16 %v64
  %v401 = vunpack.c.l.b16 %v65
  %v402 = vunpack.c.h.b16 %v65
  %v403 = vunpack.c.l.b16 %v66
  %v404 = vunpack.c.h.b16 %v66
  %v405 = vunpack.c.l.b16 %v67
  %v406 = vunpack.c.h.b16 %v67
  %v407 = vunpack.c.l.b16 %v68
  %v408 = vunpack.c.h.b16 %v68
  %v409 = vunpack.c.l.b16 %v69
  %v410 = vunpack.c.h.b16 %v69
  %v411 = vunpack.c.l.b16 %v70
  %v412 = vunpack.c.h.b16 %v70
  %v413 = vunpack.c.l.b16 %v71
  %v414 = vunpack.c.h.b16 %v71
  %v415 = vunpack.c.l.b16 %v72
  %v416 = vunpack.c.h.b16 %v72
  %v417 = vunpack.c.l.b16 %v73
  %v418 = vunpack.c.h.b16 %v73
  %v419 = vunpack.c.l.b16 %v74
  %v420 = vunpack.c.h.b16 %v74
  %v421 = vunpack.c.l.b16 %v75
  %v422 = vunpack.c.h.b16 %v75
  %v423 = vunpack.c.l.b16 %v76
  %v424 = vunpack.c.h.b16 %v76
  %v425 = vunpack.c.l.b16 %v77
  %v426 = vunpack.c.h.b16 %v77
  %v427 = vunpack.c.l.b16 %v78
  %v428 = vunpack.c.h.b16 %v78
  %v429 = vunpack.c.l.b16 %v79
  %v430 = vunpack.c.h.b16 %v79
  %v431 = vunpack.c.l.b16 %v80
  %v432 = vunpack.c.h.b16 %v80
  %v433 = vunpack.c.l.b16 %v81
  %v434 = vunpack.c.h.b16 %v81
  %v435 = vunpack.c.l.b16 %v82
  %v436 = vunpack.c.h.b16 %v82
  %v437 = vunpack.c.l.b16 %v83
  %v438 = vunpack.c.h.b16 %v83
  %v439 = vunpack.c.l.b16 %v84
  %v440 = vunpack.c.h.b16 %v84
  %v441 = vunpack.c.l.b16 %v85
  %v442 = vunpack.c.h.b16 %v85
  %v443 = vunpack.c.l.b16 %v86
  %v444 = vunpack.c.h.b16 %v86
  %v445 = vunpack.c.l.b16 %v87
  %v446 = vunpack.c.h.b16 %v87
  %v447 = vunpack.c.l.b16 %v88
  %v448 = vunpack.c.h.b16 %v88
  %v449 = vunpack.c.l.b16 %v89
  %v450 = vunpack.c.h.b16 %v89
  %v451 = vunpack.c.l.b16 %v90
  %v452 = vunpack.c.h.b16 %v90
  %v453 = vunpack.c.l.b16 %v91
  %v454 = vunpack.c.h.b16 %v91
  %v455 = vunpack.c.l.b16 %v92
  %v456 = vunpack.c.h.b16 %v92
  %v457 = vunpack.c.l.b16 %v93
  %v458 = vunpack.c.h.b16 %v93
  %v459 = vunpack.c.l.b16 %v94
  %v460 = vunpack.c.h.b16 %v94
  %v461 = vunpack.c.l.b16 %v95
  %v462 = vunpack.c.h.b16 %v95
  %v463 = vunpack.c.l.b16 %v96
  %v464 = vunpack.c.h.b16 %v96
  %v465 = vunpack.c.l.b16 %v97
  %v466 = vunpack.c.h.b16 %v97
  %v467 = vunpack.c.l.b16 %v98
  %v468 = vunpack.c.h.b16 %v98
  %v469 = vunpack.c.l.b16 %v99
  %v470 = vunpack.c.h.b16 %v99
  %v471 = vunpack.c.l.b16 %v100
  %v472 = vunpack.c.h.b16 %v100
  %v473 = vunpack.c.l.b16 %v101
  %v474 = vunpack.c.h.b16 %v101
  %v475 = vunpack.c.l.b16 %v102
  %v476 = vunpack.c.h.b16 %v102
  %v477 = vunpack.c.l.b16 %v103
  %v478 = vunpack.c.h.b16 %v103
  %v479 = vunpack.c.l.b16 %v104
  %v480 = vunpack.c.h.b16 %v104
  %v481 = vunpack.c.l.b16 %v105
  %v482 = vunpack.c.h.b16 %v105
  %v483 = vunpack.c.l.b16 %v106
  %v484 = vunpack.c.h.b16 %v106
  %v485 = vunpack.c.l.b16 %v107
  %v486 = vunpack.c.h.b16 %v107
  %v487 = vunpack.c.l.b16 %v108
  %v488 = vunpack.c.h.b16 %v108
  %v489 = vunpack.c.l.b16 %v109
  %v490 = vunpack.c.h.b16 %v109
  %v491 = vunpack.c.l.b16 %v110
  %v492 = vunpack.c.h.b16 %v110
  %v493 = vunpack.c.l.b16 %v111
  %v494 = vunpack.c.h.b16 %v111
  %v495 = vunpack.c.l.b16 %v112
  %v496 = vunpack.c.h.b16 %v112
  %v497 = vunpack.c.l.b16 %v113
  %v498 = vunpack.c.h.b16 %v113
  %v499 = vunpack.c.l.b16 %v114
  %v500 = vunpack.c.h.b16 %v114
  %v501 = vunpack.c.l.b16 %v115
  %v502 = vunpack.c.h.b16 %v115
  %v503 = vunpack.c.l.b16 %v116
  %v504 = vunpack.c.h.b16 %v116
  %v505 = vunpack.c.l.b16 %v117
  %v506 = vunpack.c.h.b16 %v117
  %v507 = vunpack.c.l.b16 %v118
  %v508 = vunpack.c.h.b16 %v118
  %v509 = vunpack.c.l.b16 %v119
  %v510 = vunpack.c.h.b16 %v119
  %v511 = vunpack.c.l.b16 %v120
  %v512 = vunpack.c.h.b16 %v120
  %v513 = vunpack.c.l.b16 %v121
  %v514 = vunpack.c.h.b16 %v121
  %v515 = vunpack.c.l.b16 %v122
  %v516 = vunpack.c.h.b16 %v122
  %v517 = vunpack.c.l.b16 %v123
  %v518 = vunpack.c.h.b16 %v123
  %v519 = vunpack.c.l.b16 %v124
  %v520 = vunpack.c.h.b16 %v124
  %v521 = vunpack.c.l.b16 %v125
  %v522 = vunpack.c.h.b16 %v125
  %v523 = vunpack.c.l.b16 %v126
  %v524 = vunpack.c.h.b16 %v126
  %v525 = vunpack.c.l.b16 %v127
  %v526 = vunpack.c.h.b16 %v127
  %v527 = vunpack.c.l.b16 %v128
  %v528 = vunpack.c.h.b16 %v128
  %v529 = vunpack.c.l.b16 %v129
  %v530 = vunpack.c.h.b16 %v129
  %v531 = vunpack.c.l.b16 %v130
  %v532 = vunpack.c.h.b16 %v130
  %v533 = vunpack.c.l.b16 %v131
  %v534 = vunpack.c.h.b16 %v131
  %v535 = vunpack.c.l.b16 %v132
  %v536 = vunpack.c.h.b16 %v132
  %v537 = vunpack.c.l.b16 %v133
  %v538 = vunpack.c.h.b16 %v133
  %v539 = vunpack.c.l.b16 %v134
  %v540 = vunpack.c.h.b16 %v134
  %v541 = vunpack.c.l.b16 %v135
  %v542 = vunpack.c.h.b16 %v135
  %v543 = vunpack.c.l.b16 %v136
  %v544 = vunpack.c.h.b16 %v136
  %v545 = vunpack.c.l.b16 %v137
  %v546 = vunpack.c.h.b16 %v137
  %v547 = vunpack.c.l.b16 %v138
  %v548 = vunpack.c.h.b16 %v138
  %v549 = vunpack.c.l.b16 %v139
  %v550 = vunpack.c.h.b16 %v139
  %v551 = vunpack.c.l.b16 %v140
  %v552 = vunpack.c.h.b16 %v140
  %v553 = vunpack.c.l.b16 %v141
  %v554 = vunpack.c.h.b16 %v141
  %v555 = vunpack.c.l.b16 %v142
  %v556 = vunpack.c.h.b16 %v142
  %v557 = vunpack.c.l.b16 %v143
  %v558 = vunpack.c.h.b16 %v143
  %v559 = vunpack.c.l.b16 %v144
  %v560 = vunpack.c.h.b16 %v144
  %v561 = vunpack.c.l.b16 %v145
  %v562 = vunpack.c.h.b16 %v145
  %v563 = vunpack.c.l.b16 %v146
  %v564 = vunpack.c.h.b16 %v146
  %v565 = vunpack.c.l.b16 %v147
  %v566 = vunpack.c.h.b16 %v147
  %v567 = vunpack.c.l.b16 %v148
  %v568 = vunpack.c.h.b16 %v148
  %v569 = vunpack.c.l.b16 %v149
  %v570 = vunpack.c.h.b16 %v149
  %v571 = vunpack.c.l.b16 %v150
  %v572 = vunpack.c.h.b16 %v150
  %v573 = vunpack.c.l.b16 %v151
  %v574 = vunpack.c.h.b16 %v151
  %v575 = vunpack.c.l.b16 %v152
  %v576 = vunpack.c.h.b16 %v152
  %v577 = vunpack.c.l.b16 %v153
  %v578 = vunpack.c.h.b16 %v153
  %v579 = vunpack.c.l.b16 %v154
  %v580 = vunpack.c.h.b16 %v154
  %v581 = vpack.c.b16 %v333, %v331
  %v582 = vpack.c.b16 %v334, %v332
  %v583 = vpack.c.b16 %v337, %v335
  %v584 = vpack.c.b16 %v338, %v336
  %v585 = vpack.c.b16 %v341, %v339
  %v586 = vpack.c.b16 %v342, %v340
  %v587 = vpack.c.b16 %v345, %v343
  %v588 = vpack.c.b16 %v346, %v344
  %v589 = vpack.c.b16 %v349, %v347
  %v590 = vpack.c.b16 %v350, %v348
  %v591 = vpack.c.b16 %v353, %v351
  %v592 = vpack.c.b16 %v354, %v352
  %v593 = vpack.c.b16 %v357, %v355
  %v594 = vpack.c.b16 %v358, %v356
  %v595 = vpack.c.b16 %v361, %v359
  %v596 = vpack.c.b16 %v362, %v360
  %v597 = vpack.c.b16 %v365, %v363
  %v598 = vpack.c.b16 %v366, %v364
  %v599 = vpack.c.b16 %v369, %v367
  %v600 = vpack.c.b16 %v370, %v368
  %v601 = vpack.c.b16 %v373, %v371
  %v602 = vpack.c.b16 %v374, %v372
  %v603 = vpack.c.b16 %v377, %v375
  %v604 = vpack.c.b16 %v378, %v376
  %v605 = vpack.c.b16 %v381, %v379
  %v606 = vpack.c.b16 %v382, %v380
  %v607 = vpack.c.b16 %v385, %v383
  %v608 = vpack.c.b16 %v386, %v384
  %v609 = vpack.c.b16 %v389, %v387
  %v610 = vpack.c.b16 %v390, %v388
  %v611 = vpack.c.b16 %v393, %v391
  %v612 = vpack.c.b16 %v394, %v392
  %v613 = vpack.c.b16 %v397, %v395
  %v614 = vpack.c.b16 %v398, %v396
  %v615 = vpack.c.b16 %v401, %v399
  %v616 = vpack.c.b16 %v402, %v400
  %v617 = vpack.c.b16 %v405, %v403
  %v618 = vpack.c.b16 %v406, %v404
  %v619 = vpack.c.b16 %v409, %v407
  %v620 = vpack.c.b16 %v410, %v408
  %v621 = vpack.c.b16 %v413, %v411
  %v622 = vpack.c.b16 %v414, %v412
  %v623 = vpack.c.b16 %v417, %v415
  %v624 = vpack.c.b16 %v418, %v416
  %v625 = vpack.c.b16 %v421, %v419
  %v626 = vpack.c.b16 %v422, %v420
  %v627 = vpack.c.b16 %v425, %v423
  %v628 = vpack.c.b16 %v426, %v424
  %v629 = vpack.c.b16 %v429, %v427
  %v630 = vpack.c.b16 %v430, %v428
  %v631 = vpack.c.b16 %v433, %v431
  %v632 = vpack.c.b16 %v434, %v432
  %v633 = vpack.c.b16 %v437, %v435
  %v634 = vpack.c.b16 %v438, %v436
  %v635 = vpack.c.b16 %v441, %v439
  %v636 = vpack.c.b16 %v442, %v440
  %v637 = vpack.c.b16 %v445, %v443
  %v638 = vpack.c.b16 %v446, %v444
  %v639 = vpack.c.b16 %v449, %v447
  %v640 = vpack.c.b16 %v450, %v448
  %v641 = vpack.c.b16 %v453, %v451
  %v642 = vpack.c.b16 %v454, %v452
  %v643 = vpack.c.b16 %v457, %v455
  %v644 = vpack.c.b16 %v458, %v456
  %v645 = vpack.c.b16 %v461, %v459
  %v646 = vpack.c.b16 %v462, %v460
  %v647 = vpack.c.b16 %v465, %v463
  %v648 = vpack.c.b16 %v466, %v464
  %v649 = vpack.c.b16 %v469, %v467
  %v650 = vpack.c.b16 %v470, %v468
  %v651 = vpack.c.b16 %v473, %v471
  %v652 = vpack.c.b16 %v474, %v472
  %v653 = vpack.c.b16 %v477, %v475
  %v654 = vpack.c.b16 %v478, %v476
  %v655 = vpack.c.b16 %v481, %v479
  %v656 = vpack.c.b16 %v482, %v480
  %v657 = vpack.c.b16 %v485, %v483
  %v658 = vpack.c.b16 %v486, %v484
  %v659 = vpack.c.b16 %v489, %v487
  %v660 = vpack.c.b16 %v490, %v488
  %v661 = vpack.c.b16 %v493, %v491
  %v662 = vpack.c.b16 %v494, %v492
  %v663 = vpack.c.b16 %v497, %v495
  %v664 = vpack.c.b16 %v498, %v496
  %v665 = vpack.c.b16 %v501, %v499
  %v666 = vpack.c.b16 %v502, %v500
  %v667 = vpack.c.b16 %v505, %v503
  %v668 = vpack.c.b16 %v506, %v504
  %v669 = vpack.c.b16 %v509, %v507
  %v670 = vpack.c.b16 %v510, %v508
  %v671 = vpack.c.b16 %v513, %v511
  %v672 = vpack.c.b16 %v514, %v512
  %v673 = vpack.c.b16 %v517, %v515
  %v674 = vpack.c.b16 %v518, %v516
  %v675 = vpack.c.b16 %v521, %v519
  %v676 = vpack.c.b16 %v522, %v520
  %v677 = vpack.c.b16 %v525, %v523
  %v678 = vpack.c.b16 %v526, %v524
  %v679 = vpack.c.b16 %v529, %v527
  %v680 = vpack.c.b16 %v530, %v528
  %v681 = vpack.c.b16 %v533, %v531
  %v682 = vpack.c.b16 %v534, %v532
  %v683 = vpack.c.b16 %v537, %v535
  %v684 = vpack.c.b16 %v538, %v536
  %v685 = vpack.c.b16 %v541, %v539
  %v686 = vpack.c.b16 %v542, %v540
  %v687 = vpack.c.b16 %v545, %v543
  %v688 = vpack.c.b16 %v546, %v544
  %v689 = vpack.c.b16 %v549, %v547
  %v690 = vpack.c.b16 %v550, %v548
  %v691 = vpack.c.b16 %v553, %v551
  %v692 = vpack.c.b16 %v554, %v552
  %v693 = vpack.c.b16 %v557, %v555
  %v694 = vpack.c.b16 %v558, %v556
  %v695 = vpack.c.b16 %v561, %v559
  %v696 = vpack.c.b16 %v562, %v560
  %v697 = vpack.c.b16 %v565, %v563
  %v698 = vpack.c.b16 %v566, %v564
  %v699 = vpack.c.b16 %v569, %v567
  %v700 = vpack.c.b16 %v570, %v568
  %v701 = vpack.c.b16 %v573, %v571
  %v702 = vpack.c.b16 %v574, %v572
  %v703 = vpack.c.b16 %v577, %v575
  %v704 = vpack.c.b16 %v578, %v576
  %v705 = vpack.c.b16 %v579, %v579
  %v706 = vpack.c.b16 %v580, %v580
  %vm831 = vcmask 850944
  %v833 = vsel %vm831, %v198, 0
  %vm835 = vcmask 1043456
  %v837 = vsel %vm835, %v705, 0
  %v840 = vsel %vm835, %v706, 0
  %842 = vmatprep.subr.bf16.mxu0 %v596
  %843 = vmatpush1.bf16.msra.mxu0 %v595
  %844 = vmatprep.subr.bf16.mxu0 %v594
  %845 = vmatpush1.bf16.msra.mxu0 %v593
  %846 = vmatprep.subr.bf16.mxu0 %v592
  %847 = vmatpush1.bf16.msra.mxu0 %v591
  %848 = vmatprep.subr.bf16.mxu0 %v590
  %849 = vmatpush1.bf16.msra.mxu0 %v589
  %850 = vmatprep.subr.bf16.mxu0 %v588
  %851 = vmatpush1.bf16.msra.mxu0 %v587
  %852 = vmatprep.subr.bf16.mxu0 %v586
  %853 = vmatpush1.bf16.msra.mxu0 %v585
  %854 = vmatprep.subr.bf16.mxu0 %v584
  %855 = vmatpush1.bf16.msra.mxu0 %v583
  %856 = vmatprep.subr.bf16.mxu0 %v582
  %857 = vmatpush1.bf16.msra.mxu0 %v581
  %858 = vmatprep.subr.bf16.mxu0 %v612
  %859 = vmatpush2.bf16.msra.mxu0 %v611
  %860 = vmatprep.subr.bf16.mxu0 %v610
  %861 = vmatpush2.bf16.msra.mxu0 %v609
  %862 = vmatprep.subr.bf16.mxu0 %v608
  %863 = vmatpush2.bf16.msra.mxu0 %v607
  %864 = vmatprep.subr.bf16.mxu0 %v606
  %865 = vmatpush2.bf16.msra.mxu0 %v605
  %866 = vmatprep.subr.bf16.mxu0 %v604
  %867 = vmatpush2.bf16.msra.mxu0 %v603
  %868 = vmatprep.subr.bf16.mxu0 %v602
  %869 = vmatpush2.bf16.msra.mxu0 %v601
  %870 = vmatprep.subr.bf16.mxu0 %v600
  %871 = vmatpush2.bf16.msra.mxu0 %v599
  %872 = vmatprep.subr.bf16.mxu0 %v598
  %873 = vmatpush2.bf16.msra.mxu0 %v597
  %874 = vmatprep.mubr.bf16.mxu0 %v192
  %875 = vmatmul.mubr.bf16.gmra.mxu0 %v191
  %v876 = vpop.f32.mrf.mxu0
  %v877 = vadd.f32 %v160, %v876
  %v878 = vpop.f32.mrf.mxu0
  %v879 = vadd.f32 %v164, %v878
  %v880 = vpop.f32.mrf.mxu0
  %v881 = vadd.f32 %v160, %v880
  %v882 = vpop.f32.mrf.mxu0
  %v883 = vadd.f32 %v164, %v882
  %884 = vdwg.mxu0
  %885 = vmatprep.subr.bf16.mxu0 %v628
  %886 = vmatpush1.bf16.msra.mxu0 %v627
  %887 = vmatprep.subr.bf16.mxu0 %v626
  %888 = vmatpush1.bf16.msra.mxu0 %v625
  %889 = vmatprep.subr.bf16.mxu0 %v624
  %890 = vmatpush1.bf16.msra.mxu0 %v623
  %891 = vmatprep.subr.bf16.mxu0 %v622
  %892 = vmatpush1.bf16.msra.mxu0 %v621
  %893 = vmatprep.subr.bf16.mxu0 %v620
  %894 = vmatpush1.bf16.msra.mxu0 %v619
  %895 = vmatprep.subr.bf16.mxu0 %v618
  %896 = vmatpush1.bf16.msra.mxu0 %v617
  %897 = vmatprep.subr.bf16.mxu0 %v616
  %898 = vmatpush1.bf16.msra.mxu0 %v615
  %899 = vmatprep.subr.bf16.mxu0 %v614
  %900 = vmatpush1.bf16.msra.mxu0 %v613
  %901 = vmatprep.subr.bf16.mxu0 %v644
  %902 = vmatpush2.bf16.msra.mxu0 %v643
  %903 = vmatprep.subr.bf16.mxu0 %v642
  %904 = vmatpush2.bf16.msra.mxu0 %v641
  %905 = vmatprep.subr.bf16.mxu0 %v640
  %906 = vmatpush2.bf16.msra.mxu0 %v639
  %907 = vmatprep.subr.bf16.mxu0 %v638
  %908 = vmatpush2.bf16.msra.mxu0 %v637
  %909 = vmatprep.subr.bf16.mxu0 %v636
  %910 = vmatpush2.bf16.msra.mxu0 %v635
  %911 = vmatprep.subr.bf16.mxu0 %v634
  %912 = vmatpush2.bf16.msra.mxu0 %v633
  %913 = vmatprep.subr.bf16.mxu0 %v632
  %914 = vmatpush2.bf16.msra.mxu0 %v631
  %915 = vmatprep.subr.bf16.mxu0 %v630
  %916 = vmatpush2.bf16.msra.mxu0 %v629
  %917 = vmatprep.mubr.bf16.mxu0 %v194
  %918 = vmatmul.mubr.bf16.gmra.mxu0 %v193
  %v919 = vpop.f32.mrf.mxu0
  %v920 = vadd.f32 %v877, %v919
  %v921 = vpop.f32.mrf.mxu0
  %v922 = vadd.f32 %v879, %v921
  %v923 = vpop.f32.mrf.mxu0
  %v924 = vadd.f32 %v881, %v923
  %v925 = vpop.f32.mrf.mxu0
  %v926 = vadd.f32 %v883, %v925
  %927 = vdwg.mxu0
  %928 = vmatprep.subr.bf16.mxu0 %v660
  %929 = vmatpush1.bf16.msra.mxu0 %v659
  %930 = vmatprep.subr.bf16.mxu0 %v658
  %931 = vmatpush1.bf16.msra.mxu0 %v657
  %932 = vmatprep.subr.bf16.mxu0 %v656
  %933 = vmatpush1.bf16.msra.mxu0 %v655
  %934 = vmatprep.subr.bf16.mxu0 %v654
  %935 = vmatpush1.bf16.msra.mxu0 %v653
  %936 = vmatprep.subr.bf16.mxu0 %v652
  %937 = vmatpush1.bf16.msra.mxu0 %v651
  %938 = vmatprep.subr.bf16.mxu0 %v650
  %939 = vmatpush1.bf16.msra.mxu0 %v649
  %940 = vmatprep.subr.bf16.mxu0 %v648
  %941 = vmatpush1.bf16.msra.mxu0 %v647
  %942 = vmatprep.subr.bf16.mxu0 %v646
  %943 = vmatpush1.bf16.msra.mxu0 %v645
  %944 = vmatprep.subr.bf16.mxu0 %v676
  %945 = vmatpush2.bf16.msra.mxu0 %v675
  %946 = vmatprep.subr.bf16.mxu0 %v674
  %947 = vmatpush2.bf16.msra.mxu0 %v673
  %948 = vmatprep.subr.bf16.mxu0 %v672
  %949 = vmatpush2.bf16.msra.mxu0 %v671
  %950 = vmatprep.subr.bf16.mxu0 %v670
  %951 = vmatpush2.bf16.msra.mxu0 %v669
  %952 = vmatprep.subr.bf16.mxu0 %v668
  %953 = vmatpush2.bf16.msra.mxu0 %v667
  %954 = vmatprep.subr.bf16.mxu0 %v666
  %955 = vmatpush2.bf16.msra.mxu0 %v665
  %956 = vmatprep.subr.bf16.mxu0 %v664
  %957 = vmatpush2.bf16.msra.mxu0 %v663
  %958 = vmatprep.subr.bf16.mxu0 %v662
  %959 = vmatpush2.bf16.msra.mxu0 %v661
  %960 = vmatprep.mubr.bf16.mxu0 %v196
  %961 = vmatmul.mubr.bf16.gmra.mxu0 %v195
  %v962 = vpop.f32.mrf.mxu0
  %v963 = vadd.f32 %v920, %v962
  %v964 = vpop.f32.mrf.mxu0
  %v965 = vadd.f32 %v922, %v964
  %v966 = vpop.f32.mrf.mxu0
  %v967 = vadd.f32 %v924, %v966
  %v968 = vpop.f32.mrf.mxu0
  %v969 = vadd.f32 %v926, %v968
  %970 = vdwg.mxu0
  %971 = vmatprep.subr.bf16.mxu0 %v692
  %972 = vmatpush1.bf16.msra.mxu0 %v691
  %973 = vmatprep.subr.bf16.mxu0 %v690
  %974 = vmatpush1.bf16.msra.mxu0 %v689
  %975 = vmatprep.subr.bf16.mxu0 %v688
  %976 = vmatpush1.bf16.msra.mxu0 %v687
  %977 = vmatprep.subr.bf16.mxu0 %v686
  %978 = vmatpush1.bf16.msra.mxu0 %v685
  %979 = vmatprep.subr.bf16.mxu0 %v684
  %980 = vmatpush1.bf16.msra.mxu0 %v683
  %981 = vmatprep.subr.bf16.mxu0 %v682
  %982 = vmatpush1.bf16.msra.mxu0 %v681
  %983 = vmatprep.subr.bf16.mxu0 %v680
  %984 = vmatpush1.bf16.msra.mxu0 %v679
  %985 = vmatprep.subr.bf16.mxu0 %v678
  %986 = vmatpush1.bf16.msra.mxu0 %v677
  %987 = vmatprep.subr.bf16.mxu0 0
  %988 = vmatpush2.bf16.msra.mxu0 0
  %989 = vmatprep.subr.bf16.mxu0 %v840
  %990 = vmatpush2.bf16.msra.mxu0 %v837
  %991 = vmatprep.subr.bf16.mxu0 %v704
  %992 = vmatpush2.bf16.msra.mxu0 %v703
  %993 = vmatprep.subr.bf16.mxu0 %v702
  %994 = vmatpush2.bf16.msra.mxu0 %v701
  %995 = vmatprep.subr.bf16.mxu0 %v700
  %996 = vmatpush2.bf16.msra.mxu0 %v699
  %997 = vmatprep.subr.bf16.mxu0 %v698
  %998 = vmatpush2.bf16.msra.mxu0 %v697
  %999 = vmatprep.subr.bf16.mxu0 %v696
  %1000 = vmatpush2.bf16.msra.mxu0 %v695
  %1001 = vmatprep.subr.bf16.mxu0 %v694
  %1002 = vmatpush2.bf16.msra.mxu0 %v693
  %1003 = vmatprep.mubr.bf16.mxu0 %v833
  %1004 = vmatmul.mubr.bf16.gmra.mxu0 %v197
  %v1005 = vpop.f32.mrf.mxu0
  %v1006 = vadd.f32 %v963, %v1005
  %v1007 = vpop.f32.mrf.mxu0
  %v1008 = vadd.f32 %v965, %v1007
  %v1009 = vpop.f32.mrf.mxu0
  %v1010 = vadd.f32 %v967, %v1009
  %v1011 = vpop.f32.mrf.mxu0
  %v1012 = vadd.f32 %v969, %v1011
  %1013 = vdwg.mxu0
  %v1014 = vmax.f32 %v1006, 0.0
  %v1015 = vmax.f32 %v1008, 0.0
  %v1016 = vmax.f32 %v1010, 0.0
  %v1017 = vmax.f32 %v1012, 0.0
  %v1018 = vld [vmem:[%s3] sm:$0x3]
  %v1020 = vlaneseq
  %v1021 = vshrl.u32 %v1020, 7
  %v1022 = vsub.s32 0, %v1021
  %v1023 = vrot.slane %v1018, %v1022
  %v1024 = vlaneseq
  %v1025 = vshrl.u32 %v1024, 7
  %v1026 = vsub.s32 1, %v1025
  %v1027 = vrot.slane %v1018, %v1026
  %v1030 = vmul.f32 %v1014, %v1023
  %v1031 = vmul.f32 %v1015, %v1027
  %v1032 = vmul.f32 %v1016, %v1023
  %v1033 = vmul.f32 %v1017, %v1027
  %vm1034 = vcmask 588800
  %v1035 = vsel %vm1034, %v1031, 0.0
  %v1036 = vadd.f32 %v1030, %v1035
  %1037 = vadd.xlane.f32.xlu0 %v1036
  %v1038 = vpop.xlane.xlu0 %1037
  %v1039 = vsel %vm1034, %v1033, 0.0
  %v1040 = vadd.f32 %v1032, %v1039
  %1041 = vadd.xlane.f32.xlu0 %v1040
  %v1042 = vpop.xlane.xlu0 %1041
  %s1043 = sld [smem:[#allocation2]]
  %v1044 = vstv %s1043
  %v1045 = vadd.f32 %v1038, %v1044
  %v1046 = vadd.f32 %v1042, %v1044
  %vm1047 = vcmask 7168
  %1048 = vst.msk [vmem:[%s5] sm:$0xff] %vm1047, %v1045
  %1049 = vst.msk [vmem:[%s5 + $0x8] sm:$0xff] %vm1047, %v1046
  // Predicated region
  $region22: #{mynet2_head.1} parent=0 // pred_check
    _
  $region23: #{mynet2_head.1} parent=0 // pred_check_branch
    %1051 = sbr.rel (0) target = $region25
  $region24: #{mynet2_head.1} parent=0 // pred_region
    _
  $region25: #{mynet2_head.1} parent=0 // pred_fallthru
    _
  // Predicated region
  $region26: #{mynet2_head.1} parent=0 // pred_check
    _
  $region27: #{mynet2_head.1} parent=0 // pred_check_branch
    %1053 = sbr.rel (0) target = $region29
  $region28: #{mynet2_head.1} parent=0 // pred_region
    _
  $region29: #{mynet2_head.1} parent=0 // pred_fallthru
    _

</llo_original>
